<compile_context>
chip_gen: v7x
topology: tpu7x:2x2x1
jax: 0.10.0
libtpu: 0.0.40
codegen_flags: <defaults>
</compile_context>

<pallas_src>
import functools
import math

import jax
import jax.numpy as jnp
from jax import lax
from jax.experimental import pallas as pl
from jax.experimental.pallas import tpu as pltpu


# ----------------------------------------------------------------------------
# Parameter / buffer setup (deterministic, mirrors nn.Module.__init__)
# ----------------------------------------------------------------------------
def make_pe(d_model: int, max_len: int = 5000, dtype=jnp.float32):
    position = jnp.arange(0.0, max_len, dtype=jnp.float32)[:, None]          # (L, 1)
    div_term = jnp.exp(
        jnp.arange(0.0, d_model, 2.0, dtype=jnp.float32)
        * -(math.log(10000.0) / d_model)
    )                                                                          # (D/2,)
    angles = position * div_term[None, :]                                      # (L, D/2)
    pe = jnp.zeros((max_len, d_model), dtype=jnp.float32)
    pe = pe.at[:, 0::2].set(jnp.sin(angles))
    pe = pe.at[:, 1::2].set(jnp.cos(angles))
    return pe.astype(dtype)                                                    # (L, D)


# ----------------------------------------------------------------------------
# Kernels
# ----------------------------------------------------------------------------
def _pe_add_kernel(x_ref, pe_ref, o_ref):
    # eval mode: dropout is identity. Native-dtype add; pe broadcasts over the
    # leading batch block when x_ref is 3-D.
    o_ref[...] = x_ref[...] + pe_ref[...]


def _pe_add_dropout_kernel(seed_ref, x_ref, pe_ref, o_ref, *, thresh, scale,
                           n_per_batch):
    # training mode: zero each element with prob p, scale survivors by 1/(1-p).
    # Mask = f(pre-mixed seed, global element index) -> tiling independent.
    y = x_ref[...] + pe_ref[...]
    seed_mix = seed_ref[0].astype(jnp.uint32)          # pre-mixed wrapper-side

    shape = y.shape
    if y.ndim == 3:
        # batch-blocked: (TB, R, C); grid = (batch_tiles,)
        tb, _, c = shape
        i = pl.program_id(0)
        bb = lax.broadcasted_iota(jnp.int32, shape, 0)
        row = lax.broadcasted_iota(jnp.int32, shape, 1)
        col = lax.broadcasted_iota(jnp.int32, shape, 2)
        idx = (i * tb + bb) * n_per_batch + row * c + col
    else:
        # row-tiled: (TR, C); grid = (row_tiles, B)
        tr, c = shape
        r_id = pl.program_id(0)
        b = pl.program_id(1)
        row = lax.broadcasted_iota(jnp.int32, shape, 0)
        col = lax.broadcasted_iota(jnp.int32, shape, 1)
        idx = b * n_per_batch + r_id * (tr * c) + row * c + col

    # short stateless hash (mul / xorshift chain), ~7 VALU ops per element
    h = idx.astype(jnp.uint32) * jnp.uint32(0x9E3779B1)
    h = h ^ seed_mix
    h = h ^ (h >> 16)
    h = h * jnp.uint32(0x85EBCA6B)
    h = h ^ (h >> 13)
    keep = h >= jnp.uint32(thresh)                     # direct uint32 compare
    o_ref[...] = jnp.where(keep, y * scale, 0.0).astype(o_ref.dtype)


# ----------------------------------------------------------------------------
# Wrapper helpers
# ----------------------------------------------------------------------------
def _fold_lane_dense(S, D):
    """Per-batch 2-D view (R, C) with a lane-dense C (multiple of 128).

    Returns (R, C, N, Np): N = S*D raw elements, Np = padded length (>= N,
    multiple of 128). If Np > N the wrapper pads the flattened slab.
    """
    N = S * D
    Np = ((N + 127) // 128) * 128
    C = 128
    for cand in (512, 256, 128):
        if Np % cand == 0:
            C = cand
            break
    return Np // C, C, N, Np


def _mix_seed(seed):
    """Pre-mix the dropout seed (lowbias32) wrapper-side; returns int32[1]."""
    s = jnp.asarray(seed, dtype=jnp.uint32)
    s = s ^ (s >> 16)
    s = s * jnp.uint32(0x7FEB352D)
    s = s ^ (s >> 15)
    s = s * jnp.uint32(0x846CA68B)
    s = s ^ (s >> 16)
    return s.astype(jnp.int32).reshape(1)


# ----------------------------------------------------------------------------
# Wrapper
# ----------------------------------------------------------------------------
def positional_encoding_forward(x, pe, *, d_model, p=0.0, training=False,
                                seed=0, target_bytes=2 * 1024 * 1024):
    """Forward pass of PositionalEncoding.

    x:  (B, S, d_model), or (B, S) (then replaced by zeros(B, S, d_model), as
        in the PyTorch module).
    pe: (max_len, d_model) sinusoidal table from make_pe().
    """
    if x.ndim == 2:
        x = jnp.zeros((x.shape[0], x.shape[1], d_model), dtype=jnp.float32)
    B, S, D = x.shape
    assert D == d_model

    if training and p >= 1.0:
        # torch.nn.Dropout(p=1.0) zeroes everything.
        return jnp.zeros((B, S, D), dtype=x.dtype)

    pe_s = pe[:S, :].astype(x.dtype)    # cast once wrapper-side (halves pe DMA in bf16)

    # Lane-dense folded view of each (S, D) slab (zero-padded if S*D % 128 != 0
    # so every output store is an unmasked full-lane vst).
    R, C, N, Np = _fold_lane_dense(S, D)
    if Np == N:
        x2 = x.reshape(B, R, C)                       # contiguous reshape: free
        pe2 = pe_s.reshape(R, C)
    else:
        x2 = jnp.pad(x.reshape(B, N), ((0, 0), (0, Np - N))).reshape(B, R, C)
        pe2 = jnp.pad(pe_s.reshape(N), (0, Np - N)).reshape(R, C)

    itemsize = jnp.dtype(x.dtype).itemsize
    slab_bytes = R * C * itemsize

    if slab_bytes >= target_bytes:
        # ---- row-tile path: grid (row_tiles, B), batch innermost so the pe
        # block index is unchanged across consecutive steps -> its DMA is
        # skipped (~B x fewer pe reads). Both axes "parallel" for megacore.
        tr = max(8, (target_bytes // (C * itemsize)) // 8 * 8)   # mult of 8 sublanes
        TR = int(min(tr, R))
        grid = (pl.cdiv(R, TR), B)
        x_spec = pl.BlockSpec((None, TR, C), lambda r, b, *_: (b, r, 0))
        pe_spec = pl.BlockSpec((TR, C), lambda r, b, *_: (r, 0))
        out_spec = pl.BlockSpec((None, TR, C), lambda r, b, *_: (b, r, 0))
        dims = ("parallel", "parallel")
    else:
        # ---- batch-block path: small per-batch slab -> pack TB whole slabs
        # into one ~target_bytes block so per-step overhead doesn't dominate.
        TB = int(min(B, max(1, target_bytes // slab_bytes)))
        grid = (pl.cdiv(B, TB),)
        x_spec = pl.BlockSpec((TB, R, C), lambda i, *_: (i, 0, 0))
        pe_spec = pl.BlockSpec((R, C), lambda i, *_: (0, 0))
        out_spec = pl.BlockSpec((TB, R, C), lambda i, *_: (i, 0, 0))
        dims = ("parallel",)

    out_shape = jax.ShapeDtypeStruct((B, R, C), x.dtype)
    compiler_params = pltpu.CompilerParams(dimension_semantics=dims)

    if training and p > 0.0:
        # keep-probability threshold as a uint32 (no int32 overflow near p=1)
        thresh = min(int(round(float(p) * (2.0 ** 32))), 2 ** 32 - 1)
        kernel = functools.partial(
            _pe_add_dropout_kernel,
            thresh=thresh, scale=1.0 / (1.0 - float(p)), n_per_batch=R * C)
        grid_spec = pltpu.PrefetchScalarGridSpec(
            num_scalar_prefetch=1, grid=grid,
            in_specs=[x_spec, pe_spec], out_specs=out_spec)
        out = pl.pallas_call(
            kernel, out_shape=out_shape, grid_spec=grid_spec,
            compiler_params=compiler_params,
        )(_mix_seed(seed), x2, pe2)
    else:
        grid_spec = pltpu.PrefetchScalarGridSpec(
            num_scalar_prefetch=0, grid=grid,
            in_specs=[x_spec, pe_spec], out_specs=out_spec)
        out = pl.pallas_call(
            _pe_add_kernel, out_shape=out_shape, grid_spec=grid_spec,
            compiler_params=compiler_params,
        )(x2, pe2)

    if Np == N:
        return out.reshape(B, S, D)
    return out.reshape(B, Np)[:, :N].reshape(B, S, D)


# ----------------------------------------------------------------------------
# Main
# ----------------------------------------------------------------------------
if __name__ == "__main__":
    B, S, D = 2, 8, 32
    dropout_p = 0.1
    key = jax.random.PRNGKey(0)

    pe = make_pe(D, max_len=5000)

    # --- 3-D input, eval mode (dropout = identity): check against plain JAX ---
    x = jax.random.normal(key, (B, S, D), dtype=jnp.float32)
    y_eval = positional_encoding_forward(x, pe, d_model=D, p=dropout_p,
                                         training=False)
    y_eval = jax.block_until_ready(y_eval)
    y_ref = x + pe[None, :S, :]
    assert y_eval.shape == (B, S, D)
    assert jnp.allclose(y_eval, y_ref, atol=1e-6, rtol=1e-6)

    # --- 2-D input path: x becomes zeros(B, S, D), so output == pe broadcast ---
    x2d = jax.random.normal(jax.random.PRNGKey(1), (B, S), dtype=jnp.float32)
    y2d = positional_encoding_forward(x2d, pe, d_model=D, p=dropout_p,
                                      training=False)
    y2d = jax.block_until_ready(y2d)
    assert y2d.shape == (B, S, D)
    assert jnp.allclose(y2d, jnp.broadcast_to(pe[None, :S, :], (B, S, D)),
                        atol=1e-6, rtol=1e-6)

    # --- padded fallback path: S*D not a multiple of 128 (D=24) ---
    D_pad = 24
    pe_pad = make_pe(D_pad, max_len=5000)
    x_pad = jax.random.normal(jax.random.PRNGKey(2), (B, S, D_pad),
                              dtype=jnp.float32)
    y_pad = positional_encoding_forward(x_pad, pe_pad, d_model=D_pad,
                                        training=False)
    y_pad = jax.block_until_ready(y_pad)
    assert y_pad.shape == (B, S, D_pad)
    assert jnp.allclose(y_pad, x_pad + pe_pad[None, :S, :], atol=1e-6, rtol=1e-6)

    # --- training mode: exercise in-kernel dropout (deterministic hash mask) ---
    y_train = positional_encoding_forward(x, pe, d_model=D, p=dropout_p,
                                          training=True, seed=42)
    y_train = jax.block_until_ready(y_train)
    assert y_train.shape == (B, S, D)
    # dropped elements are exactly zero; survivors are scaled by 1/(1-p)
    dropped = jnp.isclose(y_train, 0.0)
    survivors_ok = jnp.where(
        dropped, True,
        jnp.isclose(y_train, y_ref / (1.0 - dropout_p), atol=1e-5, rtol=1e-5))
    assert bool(jnp.all(survivors_ok))
    # same seed -> identical mask (deterministic, tiling-independent)
    y_train2 = positional_encoding_forward(x, pe, d_model=D, p=dropout_p,
                                           training=True, seed=42)
    y_train2 = jax.block_until_ready(y_train2)
    assert bool(jnp.all(y_train2 == y_train))

    print("KERNEL_OK")
</pallas_src>

<mosaic_0001>
module attributes {stable_mosaic.version = 11 : i64} {
  func.func @_pe_add_kernel(%arg0: i32, %arg1: memref<2x1x256xf32, #tpu.memory_space<vmem>>, %arg2: memref<1x256xf32, #tpu.memory_space<vmem>>, %arg3: memref<2x1x256xf32, #tpu.memory_space<vmem>>) attributes {dimension_semantics = [#tpu.dimension_semantics<parallel>], iteration_bounds = array<i64: 1>, scalar_prefetch = 0 : i64, scratch_operands = 0 : i64, tpu.core_type = #tpu.core_type<tc>, window_params = [{transform_indices = @transform_0, window_bounds = array<i64: 2, 1, 256>}, {pipeline_mode = #tpu.pipeline_mode<synchronous>, transform_indices = @transform_1, window_bounds = array<i64: 1, 256>}, {transform_indices = @transform_2, window_bounds = array<i64: 2, 1, 256>}]} {
    %c0 = arith.constant 0 : index
    %c0_0 = arith.constant 0 : index
    %c0_1 = arith.constant 0 : index
    %0 = vector.load %arg1[%c0, %c0_0, %c0_1] : memref<2x1x256xf32, #tpu.memory_space<vmem>>, vector<2x1x256xf32>
    %c0_2 = arith.constant 0 : index
    %c0_3 = arith.constant 0 : index
    %1 = vector.load %arg2[%c0_2, %c0_3] : memref<1x256xf32, #tpu.memory_space<vmem>>, vector<1x256xf32>
    %2 = vector.shape_cast %1 : vector<1x256xf32> to vector<1x1x256xf32>
    %3 = vector.broadcast %2 : vector<1x1x256xf32> to vector<2x1x256xf32>
    %4 = arith.addf %0, %3 : vector<2x1x256xf32>
    %c0_4 = arith.constant 0 : index
    %c0_5 = arith.constant 0 : index
    %c0_6 = arith.constant 0 : index
    %5 = vector.load %arg3[%c0_4, %c0_5, %c0_6] : memref<2x1x256xf32, #tpu.memory_space<vmem>>, vector<2x1x256xf32>
    tpu.vector_store %arg3[%c0_4, %c0_5, %c0_6], %4 {strides = array<i32>} : memref<2x1x256xf32, #tpu.memory_space<vmem>>, vector<2x1x256xf32>,
    return
  }
  func.func @transform_0(%arg0: i32) -> (i32, i32, i32) {
    %c0_i32 = arith.constant 0 : i32
    %c0_i32_0 = arith.constant 0 : i32
    %c0_i32_1 = arith.constant 0 : i32
    return %arg0, %c0_i32, %c0_i32_0 : i32, i32, i32
  }
  func.func @transform_1(%arg0: i32) -> (i32, i32) {
    %c0_i32 = arith.constant 0 : i32
    %c0_i32_0 = arith.constant 0 : i32
    %c0_i32_1 = arith.constant 0 : i32
    return %c0_i32, %c0_i32_0 : i32, i32
  }
  func.func @transform_2(%arg0: i32) -> (i32, i32, i32) {
    %c0_i32 = arith.constant 0 : i32
    %c0_i32_0 = arith.constant 0 : i32
    %c0_i32_1 = arith.constant 0 : i32
    return %arg0, %c0_i32, %c0_i32_0 : i32, i32, i32
  }
}

</mosaic_0001>

<llo_original>
// kernel: tpu_custom_call.1
$region0: #{tpu_custom_call.1}
  #allocation0 [shape = 'u32[]', space=smem, size = 0x4, offset = 0x4, fixed_abs, tag = 'smem constant byte address 0x4 - core index']
  #allocation1 [shape = 'u32[144,128]{1,0:T(1,128)}', space=vmem, size = 0x12000, scoped, tag = 'internal scratch']
  %s0 = inlined_call_operand.hbm [shape: f32[2,1,256], index: 0, kind: input, shape index: {}]
  %s1 = inlined_call_operand.vmem [shape: f32[1,256], index: 1, kind: input, shape index: {}]
  %s2 = inlined_call_operand.hbm [shape: f32[2,1,256], index: 2, kind: output, shape index: {}]
  %s3 = sld [smem:[#allocation0]]
  $region22: #{tpu_custom_call.1} parent=0
    _
  %s5 = ssub.s32 1, %s3
  %s6 = scalar_select 0, %s5, %s3
  $region1: #{tpu_custom_call.1} parent=0
    #allocation2 [shape = 'u8[2048]{0}', space=vmem, size = 0x800, scoped, tag = 'input window, operand 0, single buffered']
    #allocation3 [shape = 's32[1]{0}', space=sflag, size = 0x4, scoped, tag = 'scoped memory for tpu_custom_call.1']
    #allocation4 [shape = 's32[1]{0}', space=sflag, size = 0x4, scoped, tag = 'scoped memory for tpu_custom_call.1']
    #allocation5 [shape = 'u8[2048]{0}', space=vmem, size = 0x800, scoped, tag = 'output window, operand 0, single buffered']
    %7 = vsyncpa [#allocation3], 0
    %8 = vsyncpa [#allocation4], 0
    // Predicated region
    $region2: #{tpu_custom_call.1} parent=1 // pred_check
      _
    $region3: #{tpu_custom_call.1} parent=1 // pred_check_branch
      %10 = sbr.rel (0) target = $region5
    $region4: #{tpu_custom_call.1} parent=1 // pred_region
      %s12 = ssub.s32 64, 64
      %13 = vsyncadd [#allocation3], %s12
      %s14 = sshll.u32 [#allocation2], 4
      %s15 = int_to_ptr.vmem [resolvable:$true] %s14
      %20 = dma.hbm_to_vmem [thread:$0]  %s0, 64, %s15, [#allocation3], 32, 32, 2
    $region5: #{tpu_custom_call.1} parent=1 // pred_fallthru
      _
    // Predicated region
    $region6: #{tpu_custom_call.1} parent=1 // pred_check
      _
    $region7: #{tpu_custom_call.1} parent=1 // pred_check_branch
      %22 = sbr.rel (0) target = $region9
    $region8: #{tpu_custom_call.1} parent=1 // pred_region
      _
    $region9: #{tpu_custom_call.1} parent=1 // pred_fallthru
      _
    // Predicated region
    $region10: #{tpu_custom_call.1} parent=1 // pred_check
      _
    $region11: #{tpu_custom_call.1} parent=1 // pred_check_branch
      %24 = sbr.rel (0) target = $region13
    $region12: #{tpu_custom_call.1} parent=1 // pred_region
      %25 = dma.done [#allocation3], 64
    $region13: #{tpu_custom_call.1} parent=1 // pred_fallthru
      _
    %v26 = vld [vmem:[#allocation2] sm:$0x3]
    %v27 = vld [vmem:[#allocation2 + $0x2] sm:$0x3]
    %v28 = vld [vmem:[%s1] sm:$0x3]
    %v29 = vadd.f32 %v26, %v28
    %v30 = vadd.f32 %v27, %v28
    %v31 = vlaneseq
    %vm32 = vcmp.ge.s32.totalorder %v31, 0
    %vm33 = vcmp.lt.s32.totalorder %v31, 256
    %vm34 = vmand %vm32, %vm33
    %35 = vst.msk [vmem:[#allocation5] sm:$0x3] %vm34, %v29
    %36 = vst.msk [vmem:[#allocation5 + $0x2] sm:$0x3] %vm34, %v30
    // Predicated region
    $region14: #{tpu_custom_call.1} parent=1 // pred_check
      _
    $region15: #{tpu_custom_call.1} parent=1 // pred_check_branch
      %38 = sbr.rel (0) target = $region17
    $region16: #{tpu_custom_call.1} parent=1 // pred_region
      %s40 = ssub.s32 64, 64
      %41 = vsyncadd [#allocation4], %s40
      %s42 = sshll.u32 [#allocation5], 4
      %s43 = int_to_ptr.vmem [resolvable:$true] %s42
      %48 = dma.vmem_to_hbm [thread:$0]  %s43, 64, %s2, [#allocation4], 32, 32, 2
    $region17: #{tpu_custom_call.1} parent=1 // pred_fallthru
      _
    // Predicated region
    $region18: #{tpu_custom_call.1} parent=1 // pred_check
      _
    $region19: #{tpu_custom_call.1} parent=1 // pred_check_branch
      %50 = sbr.rel (0) target = $region21
    $region20: #{tpu_custom_call.1} parent=1 // pred_region
      %51 = dma.done [#allocation4], 64
    $region21: #{tpu_custom_call.1} parent=1 // pred_fallthru
      _
    %52 = vsyncpa [#allocation3], 1
    %53 = vsyncpa [#allocation4], 1

</llo_original>
